<compile_context>
chip_gen: v7x
topology: tpu7x:2x2x1
jax: 0.10.0
libtpu: 0.0.40
codegen_flags: <defaults>
</compile_context>

<pallas_src>
import functools

import jax
import jax.numpy as jnp
from jax import lax
from jax.experimental import pallas as pl
from jax.experimental.pallas import tpu as pltpu


# Requested scoped VMEM: above v5e's 16 MiB default, comfortably under v7x's 64 MiB.
_VMEM_LIMIT_BYTES = 48 * 1024 * 1024
# Working-set budget used when clamping the spatial tile (headroom for Mosaic scratch).
_TILE_VMEM_BUDGET = 36 * 1024 * 1024

_INV_SQRT2 = 0.7071067811865476


def _gelu_exact(x):
    # PyTorch nn.GELU() default is the exact (erf-based) GELU.
    return 0.5 * x * (1.0 + lax.erf(x * _INV_SQRT2))


def _round_up(v, m):
    return (v + m - 1) // m * m


def _pick_tile(s, cin, ch, cout, itemsize, tile_s):
    """Pick the spatial tile: multiple of 128, <= round_up(S,128), fits VMEM budget."""
    tile = max(128, min(_round_up(tile_s, 128), _round_up(s, 128)))
    wgt_bytes = (ch * cin + ch + cout * ch + cout) * itemsize
    while tile > 128:
        need = (2 * tile * (cin + cout) * itemsize   # double-buffered in/out activation tiles
                + 2 * tile * ch * 4                  # f32 intermediate h + GELU temporaries
                + wgt_bytes)                         # resident weights (single-buffered)
        if need <= _TILE_VMEM_BUDGET:
            break
        tile -= 128
    return tile
    # TODO(synk): for very large hidden dims (Ch >= 2048) add a K-tiled grid axis over Ch
    # ("arbitrary") with a VMEM f32 accumulator instead of holding full W1/W2 in VMEM.


def _cmlp_kernel(x_ref, w1_ref, b1_ref, w2_ref, b2_ref, o_ref, *, approximate_gelu):
    # x_ref : (1, Cin, TS)   tile of spatial positions (lanes), channels on sublanes
    # w1_ref: (Ch, Cin)      full, resident
    # b1_ref: (Ch, 1)        full, resident
    # w2_ref: (Cout, Ch)     full, resident
    # b2_ref: (Cout, 1)      full, resident
    # o_ref : (1, Cout, TS)
    x = x_ref[0]                                           # (Cin, TS)
    w1 = w1_ref[...]
    h = jnp.dot(w1, x, preferred_element_type=jnp.float32) + b1_ref[...]
    if approximate_gelu:
        h = jax.nn.gelu(h, approximate=True)               # tanh → EUP slot (v6e/v7x)
    else:
        h = _gelu_exact(h)                                 # matches PyTorch nn.GELU()
    # Dropout with p=0.0 is the identity; nothing to do.
    w2 = w2_ref[...]
    y = jnp.dot(w2, h.astype(w2.dtype), preferred_element_type=jnp.float32) + b2_ref[...]
    o_ref[0] = y.astype(o_ref.dtype)


@functools.partial(
    jax.jit, static_argnames=("tile_s", "single_buffer_weights", "approximate_gelu")
)
def _cmlp_forward_impl(x_ncdhw, w1, b1, w2, b2, *, tile_s, single_buffer_weights,
                       approximate_gelu):
    n, cin, d, h, w = x_ncdhw.shape
    ch = w1.shape[0]
    cout = w2.shape[0]
    s = d * h * w

    # NCDHW -> (N, Cin, S): a free, contiguous reshape (no HBM transpose).
    x3 = x_ncdhw.reshape(n, cin, s)

    itemsize = jnp.dtype(x_ncdhw.dtype).itemsize
    tile = _pick_tile(s, cin, ch, cout, itemsize, tile_s)
    s_pad = pl.cdiv(s, tile) * tile
    if s_pad != s:  # avoid the extra HBM pad copy when S already divides the tile
        x3 = jnp.pad(x3, ((0, 0), (0, 0), (0, s_pad - s)))

    grid = (n, s_pad // tile)

    def weight_spec(shape):
        # Constant index map → nothing to pipeline; single-buffer to halve weight VMEM.
        if single_buffer_weights:
            return pl.BlockSpec(shape, lambda i, j: (0, 0), pipeline_mode=pl.Buffered(1))
        return pl.BlockSpec(shape, lambda i, j: (0, 0))

    kernel = functools.partial(_cmlp_kernel, approximate_gelu=approximate_gelu)

    out3 = pl.pallas_call(
        kernel,
        out_shape=jax.ShapeDtypeStruct((n, cout, s_pad), x_ncdhw.dtype),
        grid_spec=pltpu.PrefetchScalarGridSpec(
            num_scalar_prefetch=0,
            grid=grid,
            in_specs=[
                pl.BlockSpec((1, cin, tile), lambda i, j: (i, 0, j)),
                weight_spec((ch, cin)),
                weight_spec((ch, 1)),
                weight_spec((cout, ch)),
                weight_spec((cout, 1)),
            ],
            out_specs=pl.BlockSpec((1, cout, tile), lambda i, j: (i, 0, j)),
        ),
        compiler_params=pltpu.CompilerParams(
            # Both axes independent → megacore / 2-TC (v7x) sharding.
            dimension_semantics=("parallel", "parallel"),
            vmem_limit_bytes=_VMEM_LIMIT_BYTES,
        ),
    )(x3, w1, b1, w2, b2)

    if s_pad != s:
        out3 = out3[:, :, :s]
    # (N, Cout, S) -> NCDHW: free reshape.
    return out3.reshape(n, cout, d, h, w)


def cmlp_forward(x_ncdhw, w1, b1, w2, b2, *, tile_s=512, approximate_gelu=False):
    """x_ncdhw: (N, Cin, D, H, W) -> (N, Cout, D, H, W)."""
    try:
        return _cmlp_forward_impl(
            x_ncdhw, w1, b1, w2, b2, tile_s=tile_s,
            single_buffer_weights=True, approximate_gelu=approximate_gelu)
    except Exception:
        # pl.Buffered(1) (single-buffered resident weights) may not be supported on
        # every jax/libtpu combination; fall back to default double buffering.
        return _cmlp_forward_impl(
            x_ncdhw, w1, b1, w2, b2, tile_s=tile_s,
            single_buffer_weights=False, approximate_gelu=approximate_gelu)


def init_cmlp_params(key, in_features, hidden_features=None, out_features=None,
                     dtype=jnp.float32):
    """Deterministic synthetic init mirroring Conv3d(inp, oup, 1x1x1).

    Stored exactly as PyTorch Conv3d holds them (after squeezing the 1x1x1 dims):
      w1: (hidden, in), b1: (hidden, 1), w2: (out, hidden), b2: (out, 1).
    """
    out_features = out_features or in_features
    hidden_features = hidden_features or in_features
    k1, k2, k3, k4 = jax.random.split(key, 4)
    bound1 = 1.0 / float(jnp.sqrt(in_features))
    bound2 = 1.0 / float(jnp.sqrt(hidden_features))
    w1 = jax.random.uniform(k1, (hidden_features, in_features), dtype, -bound1, bound1)
    b1 = jax.random.uniform(k2, (hidden_features, 1), dtype, -bound1, bound1)
    w2 = jax.random.uniform(k3, (out_features, hidden_features), dtype, -bound2, bound2)
    b2 = jax.random.uniform(k4, (out_features, 1), dtype, -bound2, bound2)
    return w1, b1, w2, b2


def cmlp_reference(x_ncdhw, w1, b1, w2, b2):
    """Pure-JAX reference (same math as the PyTorch module in eval mode)."""
    h = jnp.einsum("oc,ncdhw->nodhw", w1, x_ncdhw) + b1.reshape(1, -1, 1, 1, 1)
    h = _gelu_exact(h)
    y = jnp.einsum("oc,ncdhw->nodhw", w2, h) + b2.reshape(1, -1, 1, 1, 1)
    return y


if __name__ == "__main__":
    key = jax.random.PRNGKey(0)
    kx, kp = jax.random.split(key)

    # Small NCDHW shapes; S = D*H*W = 128 so the default path uses one lane-dense
    # 128-wide spatial tile per batch item with no padding.
    N, Cin, D, H, W = 2, 4, 2, 8, 8
    hidden = 16

    x = jax.random.normal(kx, (N, Cin, D, H, W), dtype=jnp.float32)
    w1, b1, w2, b2 = init_cmlp_params(kp, Cin, hidden_features=hidden)

    out = cmlp_forward(x, w1, b1, w2, b2)
    out = jax.block_until_ready(out)

    ref = cmlp_reference(x, w1, b1, w2, b2)
    assert out.shape == (N, Cin, D, H, W), out.shape
    assert jnp.allclose(out, ref, atol=1e-5, rtol=1e-5), float(jnp.max(jnp.abs(out - ref)))

    print("KERNEL_OK")
</pallas_src>

<mosaic_0001>
module attributes {stable_mosaic.version = 11 : i64} {
  func.func @_cmlp_kernel(%arg0: i32, %arg1: i32, %arg2: memref<1x4x128xf32, #tpu.memory_space<vmem>>, %arg3: memref<16x4xf32, #tpu.memory_space<vmem>>, %arg4: memref<16x1xf32, #tpu.memory_space<vmem>>, %arg5: memref<4x16xf32, #tpu.memory_space<vmem>>, %arg6: memref<4x1xf32, #tpu.memory_space<vmem>>, %arg7: memref<1x4x128xf32, #tpu.memory_space<vmem>>) attributes {dimension_semantics = [#tpu.dimension_semantics<parallel>, #tpu.dimension_semantics<parallel>], iteration_bounds = array<i64: 2, 1>, scalar_prefetch = 0 : i64, scratch_operands = 0 : i64, tpu.core_type = #tpu.core_type<tc>, window_params = [{transform_indices = @transform_0, window_bounds = array<i64: 1, 4, 128>}, {pipeline_mode = #tpu.pipeline_mode<synchronous>, transform_indices = @transform_1, window_bounds = array<i64: 16, 4>}, {pipeline_mode = #tpu.pipeline_mode<synchronous>, transform_indices = @transform_2, window_bounds = array<i64: 16, 1>}, {pipeline_mode = #tpu.pipeline_mode<synchronous>, transform_indices = @transform_3, window_bounds = array<i64: 4, 16>}, {pipeline_mode = #tpu.pipeline_mode<synchronous>, transform_indices = @transform_4, window_bounds = array<i64: 4, 1>}, {transform_indices = @transform_5, window_bounds = array<i64: 1, 4, 128>}]} {
    %c0 = arith.constant 0 : index
    %c0_0 = arith.constant 0 : index
    %c0_1 = arith.constant 0 : index
    %0 = vector.load %arg2[%c0, %c0_0, %c0_1] : memref<1x4x128xf32, #tpu.memory_space<vmem>>, vector<1x4x128xf32>
    %1 = vector.shape_cast %0 : vector<1x4x128xf32> to vector<4x128xf32>
    %c0_2 = arith.constant 0 : index
    %c0_3 = arith.constant 0 : index
    %2 = vector.load %arg3[%c0_2, %c0_3] : memref<16x4xf32, #tpu.memory_space<vmem>>, vector<16x4xf32>
    %cst = arith.constant dense<0.000000e+00> : vector<16x128xf32>
    %3 = tpu.matmul %2, %1, %cst {dimension_numbers = #tpu.dot_dimension_numbers<[1], [0], [0], [1], [0, 0, 1, 1], [], []>} : vector<16x4xf32>, vector<4x128xf32>, vector<16x128xf32> -> vector<16x128xf32>
    %c0_4 = arith.constant 0 : index
    %c0_5 = arith.constant 0 : index
    %4 = vector.load %arg4[%c0_4, %c0_5] : memref<16x1xf32, #tpu.memory_space<vmem>>, vector<16x1xf32>
    %5 = vector.broadcast %4 : vector<16x1xf32> to vector<16x128xf32>
    %6 = arith.addf %3, %5 : vector<16x128xf32>
    %cst_6 = arith.constant 5.000000e-01 : f32
    %7 = vector.broadcast %cst_6 : f32 to vector<16x128xf32>
    %8 = arith.mulf %7, %6 : vector<16x128xf32>
    %cst_7 = arith.constant 0.707106769 : f32
    %9 = vector.broadcast %cst_7 : f32 to vector<16x128xf32>
    %10 = arith.mulf %6, %9 : vector<16x128xf32>
    %11 = math.erf %10 : vector<16x128xf32>
    %cst_8 = arith.constant 1.000000e+00 : f32
    %12 = vector.broadcast %cst_8 : f32 to vector<16x128xf32>
    %13 = arith.addf %12, %11 : vector<16x128xf32>
    %14 = arith.mulf %8, %13 : vector<16x128xf32>
    %c0_9 = arith.constant 0 : index
    %c0_10 = arith.constant 0 : index
    %15 = vector.load %arg5[%c0_9, %c0_10] : memref<4x16xf32, #tpu.memory_space<vmem>>, vector<4x16xf32>
    %cst_11 = arith.constant dense<0.000000e+00> : vector<4x128xf32>
    %16 = tpu.matmul %15, %14, %cst_11 {dimension_numbers = #tpu.dot_dimension_numbers<[1], [0], [0], [1], [0, 0, 1, 1], [], []>} : vector<4x16xf32>, vector<16x128xf32>, vector<4x128xf32> -> vector<4x128xf32>
    %c0_12 = arith.constant 0 : index
    %c0_13 = arith.constant 0 : index
    %17 = vector.load %arg6[%c0_12, %c0_13] : memref<4x1xf32, #tpu.memory_space<vmem>>, vector<4x1xf32>
    %18 = vector.broadcast %17 : vector<4x1xf32> to vector<4x128xf32>
    %19 = arith.addf %16, %18 : vector<4x128xf32>
    %c0_14 = arith.constant 0 : index
    %c0_15 = arith.constant 0 : index
    %c0_16 = arith.constant 0 : index
    %20 = vector.load %arg7[%c0_14, %c0_15, %c0_16] : memref<1x4x128xf32, #tpu.memory_space<vmem>>, vector<1x4x128xf32>
    %21 = vector.shape_cast %20 : vector<1x4x128xf32> to vector<4x128xf32>
    %22 = vector.shape_cast %19 : vector<4x128xf32> to vector<1x4x128xf32>
    tpu.vector_store %arg7[%c0_14, %c0_15, %c0_16], %22 {strides = array<i32>} : memref<1x4x128xf32, #tpu.memory_space<vmem>>, vector<1x4x128xf32>,
    return
  }
  func.func @transform_0(%arg0: i32, %arg1: i32) -> (i32, i32, i32) {
    %c0_i32 = arith.constant 0 : i32
    %c0_i32_0 = arith.constant 0 : i32
    return %arg0, %c0_i32, %arg1 : i32, i32, i32
  }
  func.func @transform_1(%arg0: i32, %arg1: i32) -> (i32, i32) {
    %c0_i32 = arith.constant 0 : i32
    %c0_i32_0 = arith.constant 0 : i32
    %c0_i32_1 = arith.constant 0 : i32
    return %c0_i32, %c0_i32_0 : i32, i32
  }
  func.func @transform_2(%arg0: i32, %arg1: i32) -> (i32, i32) {
    %c0_i32 = arith.constant 0 : i32
    %c0_i32_0 = arith.constant 0 : i32
    %c0_i32_1 = arith.constant 0 : i32
    return %c0_i32, %c0_i32_0 : i32, i32
  }
  func.func @transform_3(%arg0: i32, %arg1: i32) -> (i32, i32) {
    %c0_i32 = arith.constant 0 : i32
    %c0_i32_0 = arith.constant 0 : i32
    %c0_i32_1 = arith.constant 0 : i32
    return %c0_i32, %c0_i32_0 : i32, i32
  }
  func.func @transform_4(%arg0: i32, %arg1: i32) -> (i32, i32) {
    %c0_i32 = arith.constant 0 : i32
    %c0_i32_0 = arith.constant 0 : i32
    %c0_i32_1 = arith.constant 0 : i32
    return %c0_i32, %c0_i32_0 : i32, i32
  }
  func.func @transform_5(%arg0: i32, %arg1: i32) -> (i32, i32, i32) {
    %c0_i32 = arith.constant 0 : i32
    %c0_i32_0 = arith.constant 0 : i32
    return %arg0, %c0_i32, %arg1 : i32, i32, i32
  }
}

module attributes {stable_mosaic.version = 11 : i64} {
  func.func @_cmlp_kernel(%arg0: i32, %arg1: i32, %arg2: memref<1x4x128xf32, #tpu.memory_space<vmem>>, %arg3: memref<16x4xf32, #tpu.memory_space<vmem>>, %arg4: memref<16x1xf32, #tpu.memory_space<vmem>>, %arg5: memref<4x16xf32, #tpu.memory_space<vmem>>, %arg6: memref<4x1xf32, #tpu.memory_space<vmem>>, %arg7: memref<1x4x128xf32, #tpu.memory_space<vmem>>) attributes {dimension_semantics = [#tpu.dimension_semantics<parallel>, #tpu.dimension_semantics<parallel>], iteration_bounds = array<i64: 2, 1>, scalar_prefetch = 0 : i64, scratch_operands = 0 : i64, tpu.core_type = #tpu.core_type<tc>, window_params = [{transform_indices = @transform_0, window_bounds = array<i64: 1, 4, 128>}, {pipeline_mode = #tpu.pipeline_mode<synchronous>, transform_indices = @transform_1, window_bounds = array<i64: 16, 4>}, {pipeline_mode = #tpu.pipeline_mode<synchronous>, transform_indices = @transform_2, window_bounds = array<i64: 16, 1>}, {pipeline_mode = #tpu.pipeline_mode<synchronous>, transform_indices = @transform_3, window_bounds = array<i64: 4, 16>}, {pipeline_mode = #tpu.pipeline_mode<synchronous>, transform_indices = @transform_4, window_bounds = array<i64: 4, 1>}, {transform_indices = @transform_5, window_bounds = array<i64: 1, 4, 128>}]} {
    %c0 = arith.constant 0 : index
    %c0_0 = arith.constant 0 : index
    %c0_1 = arith.constant 0 : index
    %0 = vector.load %arg2[%c0, %c0_0, %c0_1] : memref<1x4x128xf32, #tpu.memory_space<vmem>>, vector<1x4x128xf32>
    %1 = vector.shape_cast %0 : vector<1x4x128xf32> to vector<4x128xf32>
    %c0_2 = arith.constant 0 : index
    %c0_3 = arith.constant 0 : index
    %2 = vector.load %arg3[%c0_2, %c0_3] : memref<16x4xf32, #tpu.memory_space<vmem>>, vector<16x4xf32>
    %cst = arith.constant dense<0.000000e+00> : vector<16x128xf32>
    %3 = tpu.matmul %2, %1, %cst {dimension_numbers = #tpu.dot_dimension_numbers<[1], [0], [0], [1], [0, 0, 1, 1], [], []>} : vector<16x4xf32>, vector<4x128xf32>, vector<16x128xf32> -> vector<16x128xf32>
    %c0_4 = arith.constant 0 : index
    %c0_5 = arith.constant 0 : index
    %4 = vector.load %arg4[%c0_4, %c0_5] : memref<16x1xf32, #tpu.memory_space<vmem>>, vector<16x1xf32>
    %5 = vector.broadcast %4 : vector<16x1xf32> to vector<16x128xf32>
    %6 = arith.addf %3, %5 : vector<16x128xf32>
    %cst_6 = arith.constant 5.000000e-01 : f32
    %7 = vector.broadcast %cst_6 : f32 to vector<16x128xf32>
    %8 = arith.mulf %7, %6 : vector<16x128xf32>
    %cst_7 = arith.constant 0.707106769 : f32
    %9 = vector.broadcast %cst_7 : f32 to vector<16x128xf32>
    %10 = arith.mulf %6, %9 : vector<16x128xf32>
    %11 = math.erf %10 : vector<16x128xf32>
    %cst_8 = arith.constant 1.000000e+00 : f32
    %12 = vector.broadcast %cst_8 : f32 to vector<16x128xf32>
    %13 = arith.addf %12, %11 : vector<16x128xf32>
    %14 = arith.mulf %8, %13 : vector<16x128xf32>
    %c0_9 = arith.constant 0 : index
    %c0_10 = arith.constant 0 : index
    %15 = vector.load %arg5[%c0_9, %c0_10] : memref<4x16xf32, #tpu.memory_space<vmem>>, vector<4x16xf32>
    %cst_11 = arith.constant dense<0.000000e+00> : vector<4x128xf32>
    %16 = tpu.matmul %15, %14, %cst_11 {dimension_numbers = #tpu.dot_dimension_numbers<[1], [0], [0], [1], [0, 0, 1, 1], [], []>} : vector<4x16xf32>, vector<16x128xf32>, vector<4x128xf32> -> vector<4x128xf32>
    %c0_12 = arith.constant 0 : index
    %c0_13 = arith.constant 0 : index
    %17 = vector.load %arg6[%c0_12, %c0_13] : memref<4x1xf32, #tpu.memory_space<vmem>>, vector<4x1xf32>
    %18 = vector.broadcast %17 : vector<4x1xf32> to vector<4x128xf32>
    %19 = arith.addf %16, %18 : vector<4x128xf32>
    %c0_14 = arith.constant 0 : index
    %c0_15 = arith.constant 0 : index
    %c0_16 = arith.constant 0 : index
    %20 = vector.load %arg7[%c0_14, %c0_15, %c0_16] : memref<1x4x128xf32, #tpu.memory_space<vmem>>, vector<1x4x128xf32>
    %21 = vector.shape_cast %20 : vector<1x4x128xf32> to vector<4x128xf32>
    %22 = vector.shape_cast %19 : vector<4x128xf32> to vector<1x4x128xf32>
    tpu.vector_store %arg7[%c0_14, %c0_15, %c0_16], %22 {strides = array<i32>} : memref<1x4x128xf32, #tpu.memory_space<vmem>>, vector<1x4x128xf32>,
    return
  }
  func.func @transform_0(%arg0: i32, %arg1: i32) -> (i32, i32, i32) {
    %c0_i32 = arith.constant 0 : i32
    %c0_i32_0 = arith.constant 0 : i32
    return %arg0, %c0_i32, %arg1 : i32, i32, i32
  }
  func.func @transform_1(%arg0: i32, %arg1: i32) -> (i32, i32) {
    %c0_i32 = arith.constant 0 : i32
    %c0_i32_0 = arith.constant 0 : i32
    %c0_i32_1 = arith.constant 0 : i32
    return %c0_i32, %c0_i32_0 : i32, i32
  }
  func.func @transform_2(%arg0: i32, %arg1: i32) -> (i32, i32) {
    %c0_i32 = arith.constant 0 : i32
    %c0_i32_0 = arith.constant 0 : i32
    %c0_i32_1 = arith.constant 0 : i32
    return %c0_i32, %c0_i32_0 : i32, i32
  }
  func.func @transform_3(%arg0: i32, %arg1: i32) -> (i32, i32) {
    %c0_i32 = arith.constant 0 : i32
    %c0_i32_0 = arith.constant 0 : i32
    %c0_i32_1 = arith.constant 0 : i32
    return %c0_i32, %c0_i32_0 : i32, i32
  }
  func.func @transform_4(%arg0: i32, %arg1: i32) -> (i32, i32) {
    %c0_i32 = arith.constant 0 : i32
    %c0_i32_0 = arith.constant 0 : i32
    %c0_i32_1 = arith.constant 0 : i32
    return %c0_i32, %c0_i32_0 : i32, i32
  }
  func.func @transform_5(%arg0: i32, %arg1: i32) -> (i32, i32, i32) {
    %c0_i32 = arith.constant 0 : i32
    %c0_i32_0 = arith.constant 0 : i32
    return %arg0, %c0_i32, %arg1 : i32, i32, i32
  }
}

</mosaic_0001>

<llo_original>
// kernel: _cmlp_forward_impl.1
$region0: #{_cmlp_forward_impl.1}
  #allocation0 [shape = 'u32[]', space=smem, size = 0x4, offset = 0x4, fixed_abs, tag = 'smem constant byte address 0x4 - core index']
  #allocation1 [shape = 'u32[144,128]{1,0:T(1,128)}', space=vmem, size = 0x12000, scoped, tag = 'internal scratch']
  %s0 = inlined_call_operand.vmem [shape: f32[2,4,128], index: 0, kind: input, shape index: {}]
  %s1 = inlined_call_operand.vmem [shape: f32[16,4], index: 1, kind: input, shape index: {}]
  %s2 = inlined_call_operand.vmem [shape: f32[16,1], index: 2, kind: input, shape index: {}]
  %s3 = inlined_call_operand.vmem [shape: f32[4,16], index: 3, kind: input, shape index: {}]
  %s4 = inlined_call_operand.vmem [shape: f32[4,1], index: 4, kind: input, shape index: {}]
  %s5 = inlined_call_operand.vmem [shape: f32[2,4,128], index: 5, kind: output, shape index: {}]
  %s6 = sld [smem:[#allocation0]]
  $region53: #{_cmlp_forward_impl.1} parent=0
    _
  %s8 = ssub.s32 1, %s6
  %s9 = scalar_select 0, %s8, %s6
  loop: start=0, step=1, limit=4
  $region2: #{_cmlp_forward_impl.1} parent=0 // loop_pre_header
    _
  $region3: #{_cmlp_forward_impl.1} parent=0 // loop_header
    %s11 = sphi 0, %s15
    %p12 = scmp.ge.s32.totalorder %s11, 4
    %s18 = sphi 0, %s30
    %s19 = sphi 0, %s26
    %s20 = sphi 0, %s18
    %s21 = sphi 0, %s19
    %s22 = sphi 0, %s20
    %s23 = sphi 0, %s21
    %s35 = sphi 0, %s37
    %s38 = sphi 0, %s35
    %s39 = sphi 0, %s38
    %s55 = sphi 0, %s39
    %s59 = sphi 0, %s59
    %s61 = sphi 0, %s59
    %s62 = sphi 0, %s61
    %s76 = sphi 0, %s62
    %s80 = sphi 0, %s80
    %s82 = sphi 0, %s80
    %s83 = sphi 0, %s82
    %s97 = sphi 0, %s83
    %s101 = sphi 0, %s101
    %s103 = sphi 0, %s101
    %s104 = sphi 0, %s103
    %s118 = sphi 0, %s104
    %s122 = sphi 0, %s122
    %s124 = sphi 0, %s122
    %s125 = sphi 0, %s124
    %s139 = sphi 0, %s125
    %s147 = sphi 0, %s149
    %s150 = sphi 0, %s147
    %s151 = sphi 0, %s150
    %s167 = sphi 0, %s151
  $region4: #{_cmlp_forward_impl.1} parent=0 // loop_header_branch
    %14 = sbr.rel (%p12) target = $region8
  $region5: #{_cmlp_forward_impl.1} parent=0 // loop_body
    %s16 = ssub.s32 %s11, 1
    %s17 = ssub.s32 %s11, 2
    %s24 = sadd.s32 1, %s19
    %p25 = scmp.ge.s32.totalorder %s24, 1
    %s26 = scalar_select %p25, 0, %s24
    %s27 = sadd.s32 1, %s18
    %s28 = scalar_select %p25, %s27, %s18
    %p29 = scmp.ge.s32.totalorder %s28, 2
    %s30 = scalar_select %p29, 0, %s28
    %s31 = ssub.s32 %s18, %s30
    %s32 = ssub.s32 %s19, %s26
    %s33 = sor.u32 %s31, %s32
    %p34 = scmp.eq.s32.totalorder %s33, 0
    %s36 = sadd.s32 %s35, 1
    %s37 = scalar_select %p34, %s35, %s36
    %p40 = pneg %p34
    %p41 = scmp.eq.s32.totalorder %s11, 1
    %p42 = por %p40, %p41
    %p43 = scmp.ne.s32.totalorder %s35, %s38
    %p44 = scmp.eq.s32.totalorder %s11, 0
    %p45 = por %p43, %p44
    %p46 = scmp.ne.s32.totalorder %s35, %s38
    %p47 = scmp.eq.s32.totalorder %s16, 1
    %p48 = por %p46, %p47
    %p49 = scmp.ne.s32.totalorder %s38, %s39
    %p50 = scmp.eq.s32.totalorder %s16, 0
    %p51 = por %p49, %p50
    %p52 = scmp.ne.s32.totalorder %s38, %s39
    %p53 = scmp.eq.s32.totalorder %s17, 1
    %p54 = por %p52, %p53
    %p56 = scmp.ne.s32.totalorder %s39, %s55
    %p57 = scmp.eq.s32.totalorder %s17, 0
    %p58 = por %p56, %p57
    %s60 = sadd.s32 %s59, 1
    %p63 = scmp.eq.s32.totalorder %s11, 1
    %p64 = scmp.ne.s32.totalorder %s59, %s61
    %p65 = scmp.eq.s32.totalorder %s11, 0
    %p66 = por %p64, %p65
    %p67 = scmp.ne.s32.totalorder %s59, %s61
    %p68 = scmp.eq.s32.totalorder %s16, 1
    %p69 = por %p67, %p68
    %p70 = scmp.ne.s32.totalorder %s61, %s62
    %p71 = scmp.eq.s32.totalorder %s16, 0
    %p72 = por %p70, %p71
    %p73 = scmp.ne.s32.totalorder %s61, %s62
    %p74 = scmp.eq.s32.totalorder %s17, 1
    %p75 = por %p73, %p74
    %p77 = scmp.ne.s32.totalorder %s62, %s76
    %p78 = scmp.eq.s32.totalorder %s17, 0
    %p79 = por %p77, %p78
    %s81 = sadd.s32 %s80, 1
    %p84 = scmp.eq.s32.totalorder %s11, 1
    %p85 = scmp.ne.s32.totalorder %s80, %s82
    %p86 = scmp.eq.s32.totalorder %s11, 0
    %p87 = por %p85, %p86
    %p88 = scmp.ne.s32.totalorder %s80, %s82
    %p89 = scmp.eq.s32.totalorder %s16, 1
    %p90 = por %p88, %p89
    %p91 = scmp.ne.s32.totalorder %s82, %s83
    %p92 = scmp.eq.s32.totalorder %s16, 0
    %p93 = por %p91, %p92
    %p94 = scmp.ne.s32.totalorder %s82, %s83
    %p95 = scmp.eq.s32.totalorder %s17, 1
    %p96 = por %p94, %p95
    %p98 = scmp.ne.s32.totalorder %s83, %s97
    %p99 = scmp.eq.s32.totalorder %s17, 0
    %p100 = por %p98, %p99
    %s102 = sadd.s32 %s101, 1
    %p105 = scmp.eq.s32.totalorder %s11, 1
    %p106 = scmp.ne.s32.totalorder %s101, %s103
    %p107 = scmp.eq.s32.totalorder %s11, 0
    %p108 = por %p106, %p107
    %p109 = scmp.ne.s32.totalorder %s101, %s103
    %p110 = scmp.eq.s32.totalorder %s16, 1
    %p111 = por %p109, %p110
    %p112 = scmp.ne.s32.totalorder %s103, %s104
    %p113 = scmp.eq.s32.totalorder %s16, 0
    %p114 = por %p112, %p113
    %p115 = scmp.ne.s32.totalorder %s103, %s104
    %p116 = scmp.eq.s32.totalorder %s17, 1
    %p117 = por %p115, %p116
    %p119 = scmp.ne.s32.totalorder %s104, %s118
    %p120 = scmp.eq.s32.totalorder %s17, 0
    %p121 = por %p119, %p120
    %s123 = sadd.s32 %s122, 1
    %p126 = scmp.eq.s32.totalorder %s11, 1
    %p127 = scmp.ne.s32.totalorder %s122, %s124
    %p128 = scmp.eq.s32.totalorder %s11, 0
    %p129 = por %p127, %p128
    %p130 = scmp.ne.s32.totalorder %s122, %s124
    %p131 = scmp.eq.s32.totalorder %s16, 1
    %p132 = por %p130, %p131
    %p133 = scmp.ne.s32.totalorder %s124, %s125
    %p134 = scmp.eq.s32.totalorder %s16, 0
    %p135 = por %p133, %p134
    %p136 = scmp.ne.s32.totalorder %s124, %s125
    %p137 = scmp.eq.s32.totalorder %s17, 1
    %p138 = por %p136, %p137
    %p140 = scmp.ne.s32.totalorder %s125, %s139
    %p141 = scmp.eq.s32.totalorder %s17, 0
    %p142 = por %p140, %p141
    %s143 = ssub.s32 %s18, %s30
    %s144 = ssub.s32 %s19, %s26
    %s145 = sor.u32 %s143, %s144
    %p146 = scmp.eq.s32.totalorder %s145, 0
    %s148 = sadd.s32 %s147, 1
    %s149 = scalar_select %p146, %s147, %s148
    %p152 = pneg %p146
    %p153 = scmp.eq.s32.totalorder %s11, 1
    %p154 = por %p152, %p153
    %p155 = scmp.ne.s32.totalorder %s147, %s150
    %p156 = scmp.eq.s32.totalorder %s11, 0
    %p157 = por %p155, %p156
    %p158 = scmp.ne.s32.totalorder %s147, %s150
    %p159 = scmp.eq.s32.totalorder %s16, 1
    %p160 = por %p158, %p159
    %p161 = scmp.ne.s32.totalorder %s150, %s151
    %p162 = scmp.eq.s32.totalorder %s16, 0
    %p163 = por %p161, %p162
    %p164 = scmp.ne.s32.totalorder %s150, %s151
    %p165 = scmp.eq.s32.totalorder %s17, 1
    %p166 = por %p164, %p165
    %p168 = scmp.ne.s32.totalorder %s151, %s167
    %p169 = scmp.eq.s32.totalorder %s17, 0
    %p170 = por %p168, %p169
    %p171 = scmp.le.s32.totalorder 1, %s11
    %p172 = scmp.lt.s32.totalorder %s11, 3
    %p173 = pnand %p171, %p172
    %p174 = pneg %p173
    // Predicated region
    $region9: #{_cmlp_forward_impl.1} parent=5 // pred_check
      _
    $region10: #{_cmlp_forward_impl.1} parent=5 // pred_check_branch
      %176 = sbr.rel (%p173) target = $region12
    $region11: #{_cmlp_forward_impl.1} parent=5 // pred_region
      %s177 = ssub.s32 %s11, 1
      // Predicated region
      $region13: #{_cmlp_forward_impl.1} parent=11 // pred_check
        %p178 = pneg %p72
      $region14: #{_cmlp_forward_impl.1} parent=11 // pred_check_branch
        %180 = sbr.rel (%p178) target = $region16
      $region15: #{_cmlp_forward_impl.1} parent=11 // pred_region
        _
      $region16: #{_cmlp_forward_impl.1} parent=11 // pred_fallthru
        _
      // Predicated region
      $region17: #{_cmlp_forward_impl.1} parent=11 // pred_check
        %p181 = pneg %p93
      $region18: #{_cmlp_forward_impl.1} parent=11 // pred_check_branch
        %183 = sbr.rel (%p181) target = $region20
      $region19: #{_cmlp_forward_impl.1} parent=11 // pred_region
        _
      $region20: #{_cmlp_forward_impl.1} parent=11 // pred_fallthru
        _
      // Predicated region
      $region21: #{_cmlp_forward_impl.1} parent=11 // pred_check
        %p184 = pneg %p114
      $region22: #{_cmlp_forward_impl.1} parent=11 // pred_check_branch
        %186 = sbr.rel (%p184) target = $region24
      $region23: #{_cmlp_forward_impl.1} parent=11 // pred_region
        _
      $region24: #{_cmlp_forward_impl.1} parent=11 // pred_fallthru
        _
      // Predicated region
      $region25: #{_cmlp_forward_impl.1} parent=11 // pred_check
        %p187 = pneg %p135
      $region26: #{_cmlp_forward_impl.1} parent=11 // pred_check_branch
        %189 = sbr.rel (%p187) target = $region28
      $region27: #{_cmlp_forward_impl.1} parent=11 // pred_region
        _
      $region28: #{_cmlp_forward_impl.1} parent=11 // pred_fallthru
        _
    $region12: #{_cmlp_forward_impl.1} parent=5 // pred_fallthru
      _
    %p190 = scmp.lt.s32.totalorder %s11, 2
    // Predicated region
    $region29: #{_cmlp_forward_impl.1} parent=5 // pred_check
      %p191 = pneg %p190
    $region30: #{_cmlp_forward_impl.1} parent=5 // pred_check_branch
      %193 = sbr.rel (%p191) target = $region32
    $region31: #{_cmlp_forward_impl.1} parent=5 // pred_region
      // Predicated region
      $region33: #{_cmlp_forward_impl.1} parent=31 // pred_check
        %p194 = pneg %p45
      $region34: #{_cmlp_forward_impl.1} parent=31 // pred_check_branch
        %196 = sbr.rel (%p194) target = $region36
      $region35: #{_cmlp_forward_impl.1} parent=31 // pred_region
        %p197 = scmp.lt.s32.totalorder %s18, 1
        %s198 = scalar_select %p197, %s18, 1
        %p199 = scmp.lt.s32.totalorder %s19, 0
        %s200 = scalar_select %p199, %s19, 0
        %s201 = sadd.s32 %s200, %s198
        %s202 = smul.addr %s201, 4
        %s203 = scalar_lea.vmem %s0, %s202
      $region36: #{_cmlp_forward_impl.1} parent=31 // pred_fallthru
        _
    $region32: #{_cmlp_forward_impl.1} parent=5 // pred_fallthru
      _
    %p204 = scmp.le.s32.totalorder 1, %s11
    %p205 = scmp.lt.s32.totalorder %s11, 3
    %p206 = pnand %p204, %p205
    %p207 = pneg %p206
    // Predicated region
    $region37: #{_cmlp_forward_impl.1} parent=5 // pred_check
      _
    $region38: #{_cmlp_forward_impl.1} parent=5 // pred_check_branch
      %209 = sbr.rel (%p206) target = $region40
    $region39: #{_cmlp_forward_impl.1} parent=5 // pred_region
      %s210 = ssub.s32 %s11, 1
      %p211 = scmp.lt.s32.totalorder %s20, 1
      %s212 = scalar_select %p211, %s20, 1
      %p213 = scmp.lt.s32.totalorder %s21, 0
      %s214 = scalar_select %p213, %s21, 0
      %s215 = sadd.s32 %s214, %s212
      %s216 = smul.addr %s215, 4
      %s217 = scalar_lea.vmem %s0, %s216
      %p218 = pneg %p51
      %p219 = pneg %p48
      %p220 = pneg %p72
      %p221 = pneg %p69
      %p222 = pneg %p93
      %p223 = pneg %p90
      %p224 = pneg %p114
      %p225 = pneg %p111
      %p226 = pneg %p135
      %p227 = pneg %p132
      %p228 = pneg %p163
      %p229 = pneg %p160
      %p230 = scmp.lt.s32.totalorder %s20, 1
      %s231 = scalar_select %p230, %s20, 1
      %p232 = scmp.lt.s32.totalorder %s21, 0
      %s233 = scalar_select %p232, %s21, 0
      %s234 = sadd.s32 %s233, %s231
      %s235 = smul.addr %s234, 4
      %s236 = scalar_lea.vmem %s5, %s235
      %p237 = scmp.lt.s32.totalorder %s20, 1
      %s238 = scalar_select %p237, %s20, 1
      %p239 = scmp.lt.s32.totalorder %s21, 0
      %s240 = scalar_select %p239, %s21, 0
      %s241 = sadd.s32 %s240, %s238
      %s242 = smul.addr %s241, 4
      %s243 = scalar_lea.vmem %s0, %s242
      %p244 = scmp.lt.s32.totalorder %s20, 1
      %s245 = scalar_select %p244, %s20, 1
      %p246 = scmp.lt.s32.totalorder %s21, 0
      %s247 = scalar_select %p246, %s21, 0
      %s248 = sadd.s32 %s247, %s245
      %s249 = smul.addr %s248, 4
      %s250 = scalar_lea.vmem %s5, %s249
      %v251 = vld [vmem:[%s243] sm:$0xf]
      %v252 = vld [vmem:[%s1] sm:$0xff]
      %v253 = vld [vmem:[%s1 + $0x8] sm:$0xff]
      %v254 = vld [vmem:[%s2] sm:$0xff]
      %v255 = vld [vmem:[%s2 + $0x8] sm:$0xff]
      %257 = vset.pattern.permute.xlu0 0
      %258 = vperm.xlu0 %257, %v254
      %v259 = vpop.permute.xlu0 %258
      %262 = vset.pattern.permute.xlu0 0
      %263 = vperm.xlu0 %262, %v255
      %v264 = vpop.permute.xlu0 %263
      %vm266 = vcmask 31744
      %v268 = vsel %vm266, %v252, 0
      %v271 = vsel %vm266, %v253, 0
      %vm273 = vcmask 1043456
      %v275 = vsel %vm273, %v251, 0
      %277 = vmatprep.subr.mxu0 0.0
      %278 = vmatpush1.msra.mxu0 %v275
      %279 = vmatprep.subr.mxu0 0.0
      %280 = vmatpush1.msra.mxu0 0.0
      %281 = vmatprep.subr.mxu0 0.0
      %282 = vmatpush1.msra.mxu0 0.0
      %283 = vmatprep.subr.mxu0 0.0
      %284 = vmatpush1.msra.mxu0 0.0
      %285 = vmatprep.subr.mxu0 0.0
      %286 = vmatpush1.msra.mxu0 0.0
      %287 = vmatprep.subr.mxu0 0.0
      %288 = vmatpush1.msra.mxu0 0.0
      %289 = vmatprep.subr.mxu0 0.0
      %290 = vmatpush1.msra.mxu0 0.0
      %291 = vmatprep.subr.mxu0 0.0
      %292 = vmatpush1.msra.mxu0 0.0
      %293 = vmatprep.subr.mxu0 0.0
      %294 = vmatpush1.msra.mxu0 0.0
      %295 = vmatprep.subr.mxu0 0.0
      %296 = vmatpush1.msra.mxu0 0.0
      %297 = vmatprep.subr.mxu0 0.0
      %298 = vmatpush1.msra.mxu0 0.0
      %299 = vmatprep.subr.mxu0 0.0
      %300 = vmatpush1.msra.mxu0 0.0
      %301 = vmatprep.subr.mxu0 0.0
      %302 = vmatpush1.msra.mxu0 0.0
      %303 = vmatprep.subr.mxu0 0.0
      %304 = vmatpush1.msra.mxu0 0.0
      %305 = vmatprep.subr.mxu0 0.0
      %306 = vmatpush1.msra.mxu0 0.0
      %307 = vmatprep.subr.mxu0 0.0
      %308 = vmatpush1.msra.mxu0 0.0
      %309 = vmatprep.subr.mxu0 0.0
      %310 = vmatpush1.msra.mxu0 0.0
      %311 = vmatprep.subr.mxu0 0.0
      %312 = vmatpush1.msra.mxu0 0.0
      %313 = vmatprep.subr.mxu0 0.0
      %314 = vmatpush1.msra.mxu0 0.0
      %315 = vmatprep.subr.mxu0 0.0
      %316 = vmatpush1.msra.mxu0 0.0
      %317 = vmatprep.subr.mxu0 0.0
      %318 = vmatpush1.msra.mxu0 0.0
      %319 = vmatprep.subr.mxu0 0.0
      %320 = vmatpush1.msra.mxu0 0.0
      %321 = vmatprep.subr.mxu0 0.0
      %322 = vmatpush1.msra.mxu0 0.0
      %323 = vmatprep.subr.mxu0 0.0
      %324 = vmatpush1.msra.mxu0 0.0
      %325 = vmatprep.subr.mxu0 0.0
      %326 = vmatpush1.msra.mxu0 0.0
      %327 = vmatprep.subr.mxu0 0.0
      %328 = vmatpush1.msra.mxu0 0.0
      %329 = vmatprep.subr.mxu0 0.0
      %330 = vmatpush1.msra.mxu0 0.0
      %331 = vmatprep.subr.mxu0 0.0
      %332 = vmatpush1.msra.mxu0 0.0
      %333 = vmatprep.subr.mxu0 0.0
      %334 = vmatpush1.msra.mxu0 0.0
      %335 = vmatprep.subr.mxu0 0.0
      %336 = vmatpush1.msra.mxu0 0.0
      %337 = vmatprep.subr.mxu0 0.0
      %338 = vmatpush1.msra.mxu0 0.0
      %339 = vmatprep.subr.mxu0 0.0
      %340 = vmatpush1.msra.mxu0 0.0
      %341 = vmatprep.mubr.f32.mxu0 0.0
      %342 = vmatmul.mubr.f32.gmra.mrb[0].mxu0 %v268
      %v343 = vpop.f32.mrb[0].mxu0
      %v344 = vadd.f32 %v259, %v343
      %v345 = vpop.f32.mrb[0].mxu0
      %346 = vmatprep.mubr.f32.mxu0 0.0
      %347 = vmatmul.mubr.f32.gmra.mrb[0].mxu0 %v271
      %v348 = vpop.f32.mrb[0].mxu0
      %v349 = vadd.f32 %v264, %v348
      %v350 = vpop.f32.mrb[0].mxu0
      %351 = vdwg.mxu0
      %v352 = vmul.f32 %v344, 0.5
      %v353 = vmul.f32 %v349, 0.5
      %v354 = vmul.f32 %v344, 0.70710677
      %v355 = vmul.f32 %v349, 0.70710677
      %v356 = verf.f32.pop %v354
      %v357 = verf.f32.pop %v355
      %v358 = vadd.f32 %v356, 1.0
      %v359 = vadd.f32 %v357, 1.0
      %v360 = vmul.f32 %v352, %v358
      %v361 = vmul.f32 %v353, %v359
      %v362 = vld [vmem:[%s3] sm:$0xf]
      %v363 = vld [vmem:[%s4] sm:$0xf]
      %365 = vset.pattern.permute.xlu0 0
      %366 = vperm.xlu0 %365, %v363
      %v367 = vpop.permute.xlu0 %366
      %vm369 = vcmask 130048
      %v371 = vsel %vm369, %v362, 0
      %373 = vmatprep.subr.mxu0 0.0
      %374 = vmatpush1.msra.mxu0 %v360
      %375 = vmatprep.subr.mxu0 0.0
      %376 = vmatpush1.msra.mxu0 %v361
      %377 = vmatprep.subr.mxu0 0.0
      %378 = vmatpush1.msra.mxu0 0.0
      %379 = vmatprep.subr.mxu0 0.0
      %380 = vmatpush1.msra.mxu0 0.0
      %381 = vmatprep.subr.mxu0 0.0
      %382 = vmatpush1.msra.mxu0 0.0
      %383 = vmatprep.subr.mxu0 0.0
      %384 = vmatpush1.msra.mxu0 0.0
      %385 = vmatprep.subr.mxu0 0.0
      %386 = vmatpush1.msra.mxu0 0.0
      %387 = vmatprep.subr.mxu0 0.0
      %388 = vmatpush1.msra.mxu0 0.0
      %389 = vmatprep.subr.mxu0 0.0
      %390 = vmatpush1.msra.mxu0 0.0
      %391 = vmatprep.subr.mxu0 0.0
      %392 = vmatpush1.msra.mxu0 0.0
      %393 = vmatprep.subr.mxu0 0.0
      %394 = vmatpush1.msra.mxu0 0.0
      %395 = vmatprep.subr.mxu0 0.0
      %396 = vmatpush1.msra.mxu0 0.0
      %397 = vmatprep.subr.mxu0 0.0
      %398 = vmatpush1.msra.mxu0 0.0
      %399 = vmatprep.subr.mxu0 0.0
      %400 = vmatpush1.msra.mxu0 0.0
      %401 = vmatprep.subr.mxu0 0.0
      %402 = vmatpush1.msra.mxu0 0.0
      %403 = vmatprep.subr.mxu0 0.0
      %404 = vmatpush1.msra.mxu0 0.0
      %405 = vmatprep.subr.mxu0 0.0
      %406 = vmatpush1.msra.mxu0 0.0
      %407 = vmatprep.subr.mxu0 0.0
      %408 = vmatpush1.msra.mxu0 0.0
      %409 = vmatprep.subr.mxu0 0.0
      %410 = vmatpush1.msra.mxu0 0.0
      %411 = vmatprep.subr.mxu0 0.0
      %412 = vmatpush1.msra.mxu0 0.0
      %413 = vmatprep.subr.mxu0 0.0
      %414 = vmatpush1.msra.mxu0 0.0
      %415 = vmatprep.subr.mxu0 0.0
      %416 = vmatpush1.msra.mxu0 0.0
      %417 = vmatprep.subr.mxu0 0.0
      %418 = vmatpush1.msra.mxu0 0.0
      %419 = vmatprep.subr.mxu0 0.0
      %420 = vmatpush1.msra.mxu0 0.0
      %421 = vmatprep.subr.mxu0 0.0
      %422 = vmatpush1.msra.mxu0 0.0
      %423 = vmatprep.subr.mxu0 0.0
      %424 = vmatpush1.msra.mxu0 0.0
      %425 = vmatprep.subr.mxu0 0.0
      %426 = vmatpush1.msra.mxu0 0.0
      %427 = vmatprep.subr.mxu0 0.0
      %428 = vmatpush1.msra.mxu0 0.0
      %429 = vmatprep.subr.mxu0 0.0
      %430 = vmatpush1.msra.mxu0 0.0
      %431 = vmatprep.subr.mxu0 0.0
      %432 = vmatpush1.msra.mxu0 0.0
      %433 = vmatprep.subr.mxu0 0.0
      %434 = vmatpush1.msra.mxu0 0.0
      %435 = vmatprep.subr.mxu0 0.0
      %436 = vmatpush1.msra.mxu0 0.0
      %437 = vmatprep.mubr.f32.mxu0 0.0
      %438 = vmatmul.mubr.f32.gmra.mrb[0].mxu0 %v371
      %v439 = vpop.f32.mrb[0].mxu0
      %v440 = vadd.f32 %v367, %v439
      %v441 = vpop.f32.mrb[0].mxu0
      %442 = vdwg.mxu0
      %443 = vst [vmem:[%s250] sm:$0xf] %v440
      %p444 = scmp.lt.s32.totalorder %s20, 1
      %s445 = scalar_select %p444, %s20, 1
      %p446 = scmp.lt.s32.totalorder %s21, 0
      %s447 = scalar_select %p446, %s21, 0
      %s448 = sadd.s32 %s447, %s445
      %s449 = smul.addr %s448, 4
      %s450 = scalar_lea.vmem %s5, %s449
      // Predicated region
      $region41: #{_cmlp_forward_impl.1} parent=39 // pred_check
        %p451 = pneg %p160
      $region42: #{_cmlp_forward_impl.1} parent=39 // pred_check_branch
        %453 = sbr.rel (%p451) target = $region44
      $region43: #{_cmlp_forward_impl.1} parent=39 // pred_region
        _
      $region44: #{_cmlp_forward_impl.1} parent=39 // pred_fallthru
        _
    $region40: #{_cmlp_forward_impl.1} parent=5 // pred_fallthru
      _
    %p454 = scmp.le.s32.totalorder 2, %s11
    // Predicated region
    $region45: #{_cmlp_forward_impl.1} parent=5 // pred_check
      %p455 = pneg %p454
    $region46: #{_cmlp_forward_impl.1} parent=5 // pred_check_branch
      %457 = sbr.rel (%p455) target = $region48
    $region47: #{_cmlp_forward_impl.1} parent=5 // pred_region
      %s458 = ssub.s32 %s11, 2
      // Predicated region
      $region49: #{_cmlp_forward_impl.1} parent=47 // pred_check
        %p459 = pneg %p166
      $region50: #{_cmlp_forward_impl.1} parent=47 // pred_check_branch
        %461 = sbr.rel (%p459) target = $region52
      $region51: #{_cmlp_forward_impl.1} parent=47 // pred_region
        %p462 = scmp.lt.s32.totalorder %s22, 1
        %s463 = scalar_select %p462, %s22, 1
        %p464 = scmp.lt.s32.totalorder %s23, 0
        %s465 = scalar_select %p464, %s23, 0
        %s466 = sadd.s32 %s465, %s463
        %s467 = smul.addr %s466, 4
        %s468 = scalar_lea.vmem %s5, %s467
      $region52: #{_cmlp_forward_impl.1} parent=47 // pred_fallthru
        _
    $region48: #{_cmlp_forward_impl.1} parent=5 // pred_fallthru
      _
  $region6: #{_cmlp_forward_impl.1} parent=0 // loop_footer
    %s15 = sadd.s32 1, %s11
  $region7: #{_cmlp_forward_impl.1} parent=0 // loop_footer_branch
    %10 = sbr.rel target = $region3
  $region8: #{_cmlp_forward_impl.1} parent=0 // loop_exit
    _

// kernel: _cmlp_forward_impl.1
$region0: #{_cmlp_forward_impl.1}
  #allocation0 [shape = 'u32[]', space=smem, size = 0x4, offset = 0x4, fixed_abs, tag = 'smem constant byte address 0x4 - core index']
  #allocation1 [shape = 'u32[144,128]{1,0:T(1,128)}', space=vmem, size = 0x12000, scoped, tag = 'internal scratch']
  %s0 = inlined_call_operand.vmem [shape: f32[2,4,128], index: 0, kind: input, shape index: {}]
  %s1 = inlined_call_operand.vmem [shape: f32[16,4], index: 1, kind: input, shape index: {}]
  %s2 = inlined_call_operand.vmem [shape: f32[16,1], index: 2, kind: input, shape index: {}]
  %s3 = inlined_call_operand.vmem [shape: f32[4,16], index: 3, kind: input, shape index: {}]
  %s4 = inlined_call_operand.vmem [shape: f32[4,1], index: 4, kind: input, shape index: {}]
  %s5 = inlined_call_operand.vmem [shape: f32[2,4,128], index: 5, kind: output, shape index: {}]
  %s6 = sld [smem:[#allocation0]]
  $region53: #{_cmlp_forward_impl.1} parent=0
    _
  %s8 = ssub.s32 1, %s6
  %s9 = scalar_select 0, %s8, %s6
  loop: start=0, step=1, limit=4
  $region2: #{_cmlp_forward_impl.1} parent=0 // loop_pre_header
    _
  $region3: #{_cmlp_forward_impl.1} parent=0 // loop_header
    %s11 = sphi 0, %s15
    %p12 = scmp.ge.s32.totalorder %s11, 4
    %s18 = sphi 0, %s30
    %s19 = sphi 0, %s26
    %s20 = sphi 0, %s18
    %s21 = sphi 0, %s19
    %s22 = sphi 0, %s20
    %s23 = sphi 0, %s21
    %s35 = sphi 0, %s37
    %s38 = sphi 0, %s35
    %s39 = sphi 0, %s38
    %s55 = sphi 0, %s39
    %s59 = sphi 0, %s59
    %s61 = sphi 0, %s59
    %s62 = sphi 0, %s61
    %s76 = sphi 0, %s62
    %s80 = sphi 0, %s80
    %s82 = sphi 0, %s80
    %s83 = sphi 0, %s82
    %s97 = sphi 0, %s83
    %s101 = sphi 0, %s101
    %s103 = sphi 0, %s101
    %s104 = sphi 0, %s103
    %s118 = sphi 0, %s104
    %s122 = sphi 0, %s122
    %s124 = sphi 0, %s122
    %s125 = sphi 0, %s124
    %s139 = sphi 0, %s125
    %s147 = sphi 0, %s149
    %s150 = sphi 0, %s147
    %s151 = sphi 0, %s150
    %s167 = sphi 0, %s151
  $region4: #{_cmlp_forward_impl.1} parent=0 // loop_header_branch
    %14 = sbr.rel (%p12) target = $region8
  $region5: #{_cmlp_forward_impl.1} parent=0 // loop_body
    %s16 = ssub.s32 %s11, 1
    %s17 = ssub.s32 %s11, 2
    %s24 = sadd.s32 1, %s19
    %p25 = scmp.ge.s32.totalorder %s24, 1
    %s26 = scalar_select %p25, 0, %s24
    %s27 = sadd.s32 1, %s18
    %s28 = scalar_select %p25, %s27, %s18
    %p29 = scmp.ge.s32.totalorder %s28, 2
    %s30 = scalar_select %p29, 0, %s28
    %s31 = ssub.s32 %s18, %s30
    %s32 = ssub.s32 %s19, %s26
    %s33 = sor.u32 %s31, %s32
    %p34 = scmp.eq.s32.totalorder %s33, 0
    %s36 = sadd.s32 %s35, 1
    %s37 = scalar_select %p34, %s35, %s36
    %p40 = pneg %p34
    %p41 = scmp.eq.s32.totalorder %s11, 1
    %p42 = por %p40, %p41
    %p43 = scmp.ne.s32.totalorder %s35, %s38
    %p44 = scmp.eq.s32.totalorder %s11, 0
    %p45 = por %p43, %p44
    %p46 = scmp.ne.s32.totalorder %s35, %s38
    %p47 = scmp.eq.s32.totalorder %s16, 1
    %p48 = por %p46, %p47
    %p49 = scmp.ne.s32.totalorder %s38, %s39
    %p50 = scmp.eq.s32.totalorder %s16, 0
    %p51 = por %p49, %p50
    %p52 = scmp.ne.s32.totalorder %s38, %s39
    %p53 = scmp.eq.s32.totalorder %s17, 1
    %p54 = por %p52, %p53
    %p56 = scmp.ne.s32.totalorder %s39, %s55
    %p57 = scmp.eq.s32.totalorder %s17, 0
    %p58 = por %p56, %p57
    %s60 = sadd.s32 %s59, 1
    %p63 = scmp.eq.s32.totalorder %s11, 1
    %p64 = scmp.ne.s32.totalorder %s59, %s61
    %p65 = scmp.eq.s32.totalorder %s11, 0
    %p66 = por %p64, %p65
    %p67 = scmp.ne.s32.totalorder %s59, %s61
    %p68 = scmp.eq.s32.totalorder %s16, 1
    %p69 = por %p67, %p68
    %p70 = scmp.ne.s32.totalorder %s61, %s62
    %p71 = scmp.eq.s32.totalorder %s16, 0
    %p72 = por %p70, %p71
    %p73 = scmp.ne.s32.totalorder %s61, %s62
    %p74 = scmp.eq.s32.totalorder %s17, 1
    %p75 = por %p73, %p74
    %p77 = scmp.ne.s32.totalorder %s62, %s76
    %p78 = scmp.eq.s32.totalorder %s17, 0
    %p79 = por %p77, %p78
    %s81 = sadd.s32 %s80, 1
    %p84 = scmp.eq.s32.totalorder %s11, 1
    %p85 = scmp.ne.s32.totalorder %s80, %s82
    %p86 = scmp.eq.s32.totalorder %s11, 0
    %p87 = por %p85, %p86
    %p88 = scmp.ne.s32.totalorder %s80, %s82
    %p89 = scmp.eq.s32.totalorder %s16, 1
    %p90 = por %p88, %p89
    %p91 = scmp.ne.s32.totalorder %s82, %s83
    %p92 = scmp.eq.s32.totalorder %s16, 0
    %p93 = por %p91, %p92
    %p94 = scmp.ne.s32.totalorder %s82, %s83
    %p95 = scmp.eq.s32.totalorder %s17, 1
    %p96 = por %p94, %p95
    %p98 = scmp.ne.s32.totalorder %s83, %s97
    %p99 = scmp.eq.s32.totalorder %s17, 0
    %p100 = por %p98, %p99
    %s102 = sadd.s32 %s101, 1
    %p105 = scmp.eq.s32.totalorder %s11, 1
    %p106 = scmp.ne.s32.totalorder %s101, %s103
    %p107 = scmp.eq.s32.totalorder %s11, 0
    %p108 = por %p106, %p107
    %p109 = scmp.ne.s32.totalorder %s101, %s103
    %p110 = scmp.eq.s32.totalorder %s16, 1
    %p111 = por %p109, %p110
    %p112 = scmp.ne.s32.totalorder %s103, %s104
    %p113 = scmp.eq.s32.totalorder %s16, 0
    %p114 = por %p112, %p113
    %p115 = scmp.ne.s32.totalorder %s103, %s104
    %p116 = scmp.eq.s32.totalorder %s17, 1
    %p117 = por %p115, %p116
    %p119 = scmp.ne.s32.totalorder %s104, %s118
    %p120 = scmp.eq.s32.totalorder %s17, 0
    %p121 = por %p119, %p120
    %s123 = sadd.s32 %s122, 1
    %p126 = scmp.eq.s32.totalorder %s11, 1
    %p127 = scmp.ne.s32.totalorder %s122, %s124
    %p128 = scmp.eq.s32.totalorder %s11, 0
    %p129 = por %p127, %p128
    %p130 = scmp.ne.s32.totalorder %s122, %s124
    %p131 = scmp.eq.s32.totalorder %s16, 1
    %p132 = por %p130, %p131
    %p133 = scmp.ne.s32.totalorder %s124, %s125
    %p134 = scmp.eq.s32.totalorder %s16, 0
    %p135 = por %p133, %p134
    %p136 = scmp.ne.s32.totalorder %s124, %s125
    %p137 = scmp.eq.s32.totalorder %s17, 1
    %p138 = por %p136, %p137
    %p140 = scmp.ne.s32.totalorder %s125, %s139
    %p141 = scmp.eq.s32.totalorder %s17, 0
    %p142 = por %p140, %p141
    %s143 = ssub.s32 %s18, %s30
    %s144 = ssub.s32 %s19, %s26
    %s145 = sor.u32 %s143, %s144
    %p146 = scmp.eq.s32.totalorder %s145, 0
    %s148 = sadd.s32 %s147, 1
    %s149 = scalar_select %p146, %s147, %s148
    %p152 = pneg %p146
    %p153 = scmp.eq.s32.totalorder %s11, 1
    %p154 = por %p152, %p153
    %p155 = scmp.ne.s32.totalorder %s147, %s150
    %p156 = scmp.eq.s32.totalorder %s11, 0
    %p157 = por %p155, %p156
    %p158 = scmp.ne.s32.totalorder %s147, %s150
    %p159 = scmp.eq.s32.totalorder %s16, 1
    %p160 = por %p158, %p159
    %p161 = scmp.ne.s32.totalorder %s150, %s151
    %p162 = scmp.eq.s32.totalorder %s16, 0
    %p163 = por %p161, %p162
    %p164 = scmp.ne.s32.totalorder %s150, %s151
    %p165 = scmp.eq.s32.totalorder %s17, 1
    %p166 = por %p164, %p165
    %p168 = scmp.ne.s32.totalorder %s151, %s167
    %p169 = scmp.eq.s32.totalorder %s17, 0
    %p170 = por %p168, %p169
    %p171 = scmp.le.s32.totalorder 1, %s11
    %p172 = scmp.lt.s32.totalorder %s11, 3
    %p173 = pnand %p171, %p172
    %p174 = pneg %p173
    // Predicated region
    $region9: #{_cmlp_forward_impl.1} parent=5 // pred_check
      _
    $region10: #{_cmlp_forward_impl.1} parent=5 // pred_check_branch
      %176 = sbr.rel (%p173) target = $region12
    $region11: #{_cmlp_forward_impl.1} parent=5 // pred_region
      %s177 = ssub.s32 %s11, 1
      // Predicated region
      $region13: #{_cmlp_forward_impl.1} parent=11 // pred_check
        %p178 = pneg %p72
      $region14: #{_cmlp_forward_impl.1} parent=11 // pred_check_branch
        %180 = sbr.rel (%p178) target = $region16
      $region15: #{_cmlp_forward_impl.1} parent=11 // pred_region
        _
      $region16: #{_cmlp_forward_impl.1} parent=11 // pred_fallthru
        _
      // Predicated region
      $region17: #{_cmlp_forward_impl.1} parent=11 // pred_check
        %p181 = pneg %p93
      $region18: #{_cmlp_forward_impl.1} parent=11 // pred_check_branch
        %183 = sbr.rel (%p181) target = $region20
      $region19: #{_cmlp_forward_impl.1} parent=11 // pred_region
        _
      $region20: #{_cmlp_forward_impl.1} parent=11 // pred_fallthru
        _
      // Predicated region
      $region21: #{_cmlp_forward_impl.1} parent=11 // pred_check
        %p184 = pneg %p114
      $region22: #{_cmlp_forward_impl.1} parent=11 // pred_check_branch
        %186 = sbr.rel (%p184) target = $region24
      $region23: #{_cmlp_forward_impl.1} parent=11 // pred_region
        _
      $region24: #{_cmlp_forward_impl.1} parent=11 // pred_fallthru
        _
      // Predicated region
      $region25: #{_cmlp_forward_impl.1} parent=11 // pred_check
        %p187 = pneg %p135
      $region26: #{_cmlp_forward_impl.1} parent=11 // pred_check_branch
        %189 = sbr.rel (%p187) target = $region28
      $region27: #{_cmlp_forward_impl.1} parent=11 // pred_region
        _
      $region28: #{_cmlp_forward_impl.1} parent=11 // pred_fallthru
        _
    $region12: #{_cmlp_forward_impl.1} parent=5 // pred_fallthru
      _
    %p190 = scmp.lt.s32.totalorder %s11, 2
    // Predicated region
    $region29: #{_cmlp_forward_impl.1} parent=5 // pred_check
      %p191 = pneg %p190
    $region30: #{_cmlp_forward_impl.1} parent=5 // pred_check_branch
      %193 = sbr.rel (%p191) target = $region32
    $region31: #{_cmlp_forward_impl.1} parent=5 // pred_region
      // Predicated region
      $region33: #{_cmlp_forward_impl.1} parent=31 // pred_check
        %p194 = pneg %p45
      $region34: #{_cmlp_forward_impl.1} parent=31 // pred_check_branch
        %196 = sbr.rel (%p194) target = $region36
      $region35: #{_cmlp_forward_impl.1} parent=31 // pred_region
        %p197 = scmp.lt.s32.totalorder %s18, 1
        %s198 = scalar_select %p197, %s18, 1
        %p199 = scmp.lt.s32.totalorder %s19, 0
        %s200 = scalar_select %p199, %s19, 0
        %s201 = sadd.s32 %s200, %s198
        %s202 = smul.addr %s201, 4
        %s203 = scalar_lea.vmem %s0, %s202
      $region36: #{_cmlp_forward_impl.1} parent=31 // pred_fallthru
        _
    $region32: #{_cmlp_forward_impl.1} parent=5 // pred_fallthru
      _
    %p204 = scmp.le.s32.totalorder 1, %s11
    %p205 = scmp.lt.s32.totalorder %s11, 3
    %p206 = pnand %p204, %p205
    %p207 = pneg %p206
    // Predicated region
    $region37: #{_cmlp_forward_impl.1} parent=5 // pred_check
      _
    $region38: #{_cmlp_forward_impl.1} parent=5 // pred_check_branch
      %209 = sbr.rel (%p206) target = $region40
    $region39: #{_cmlp_forward_impl.1} parent=5 // pred_region
      %s210 = ssub.s32 %s11, 1
      %p211 = scmp.lt.s32.totalorder %s20, 1
      %s212 = scalar_select %p211, %s20, 1
      %p213 = scmp.lt.s32.totalorder %s21, 0
      %s214 = scalar_select %p213, %s21, 0
      %s215 = sadd.s32 %s214, %s212
      %s216 = smul.addr %s215, 4
      %s217 = scalar_lea.vmem %s0, %s216
      %p218 = pneg %p51
      %p219 = pneg %p48
      %p220 = pneg %p72
      %p221 = pneg %p69
      %p222 = pneg %p93
      %p223 = pneg %p90
      %p224 = pneg %p114
      %p225 = pneg %p111
      %p226 = pneg %p135
      %p227 = pneg %p132
      %p228 = pneg %p163
      %p229 = pneg %p160
      %p230 = scmp.lt.s32.totalorder %s20, 1
      %s231 = scalar_select %p230, %s20, 1
      %p232 = scmp.lt.s32.totalorder %s21, 0
      %s233 = scalar_select %p232, %s21, 0
      %s234 = sadd.s32 %s233, %s231
      %s235 = smul.addr %s234, 4
      %s236 = scalar_lea.vmem %s5, %s235
      %p237 = scmp.lt.s32.totalorder %s20, 1
      %s238 = scalar_select %p237, %s20, 1
      %p239 = scmp.lt.s32.totalorder %s21, 0
      %s240 = scalar_select %p239, %s21, 0
      %s241 = sadd.s32 %s240, %s238
      %s242 = smul.addr %s241, 4
      %s243 = scalar_lea.vmem %s0, %s242
      %p244 = scmp.lt.s32.totalorder %s20, 1
      %s245 = scalar_select %p244, %s20, 1
      %p246 = scmp.lt.s32.totalorder %s21, 0
      %s247 = scalar_select %p246, %s21, 0
      %s248 = sadd.s32 %s247, %s245
      %s249 = smul.addr %s248, 4
      %s250 = scalar_lea.vmem %s5, %s249
      %v251 = vld [vmem:[%s243] sm:$0xf]
      %v252 = vld [vmem:[%s1] sm:$0xff]
      %v253 = vld [vmem:[%s1 + $0x8] sm:$0xff]
      %v254 = vld [vmem:[%s2] sm:$0xff]
      %v255 = vld [vmem:[%s2 + $0x8] sm:$0xff]
      %257 = vset.pattern.permute.xlu0 0
      %258 = vperm.xlu0 %257, %v254
      %v259 = vpop.permute.xlu0 %258
      %262 = vset.pattern.permute.xlu0 0
      %263 = vperm.xlu0 %262, %v255
      %v264 = vpop.permute.xlu0 %263
      %vm266 = vcmask 31744
      %v268 = vsel %vm266, %v252, 0
      %v271 = vsel %vm266, %v253, 0
      %vm273 = vcmask 1043456
      %v275 = vsel %vm273, %v251, 0
      %277 = vmatprep.subr.mxu0 0.0
      %278 = vmatpush1.msra.mxu0 %v275
      %279 = vmatprep.subr.mxu0 0.0
      %280 = vmatpush1.msra.mxu0 0.0
      %281 = vmatprep.subr.mxu0 0.0
      %282 = vmatpush1.msra.mxu0 0.0
      %283 = vmatprep.subr.mxu0 0.0
      %284 = vmatpush1.msra.mxu0 0.0
      %285 = vmatprep.subr.mxu0 0.0
      %286 = vmatpush1.msra.mxu0 0.0
      %287 = vmatprep.subr.mxu0 0.0
      %288 = vmatpush1.msra.mxu0 0.0
      %289 = vmatprep.subr.mxu0 0.0
      %290 = vmatpush1.msra.mxu0 0.0
      %291 = vmatprep.subr.mxu0 0.0
      %292 = vmatpush1.msra.mxu0 0.0
      %293 = vmatprep.subr.mxu0 0.0
      %294 = vmatpush1.msra.mxu0 0.0
      %295 = vmatprep.subr.mxu0 0.0
      %296 = vmatpush1.msra.mxu0 0.0
      %297 = vmatprep.subr.mxu0 0.0
      %298 = vmatpush1.msra.mxu0 0.0
      %299 = vmatprep.subr.mxu0 0.0
      %300 = vmatpush1.msra.mxu0 0.0
      %301 = vmatprep.subr.mxu0 0.0
      %302 = vmatpush1.msra.mxu0 0.0
      %303 = vmatprep.subr.mxu0 0.0
      %304 = vmatpush1.msra.mxu0 0.0
      %305 = vmatprep.subr.mxu0 0.0
      %306 = vmatpush1.msra.mxu0 0.0
      %307 = vmatprep.subr.mxu0 0.0
      %308 = vmatpush1.msra.mxu0 0.0
      %309 = vmatprep.subr.mxu0 0.0
      %310 = vmatpush1.msra.mxu0 0.0
      %311 = vmatprep.subr.mxu0 0.0
      %312 = vmatpush1.msra.mxu0 0.0
      %313 = vmatprep.subr.mxu0 0.0
      %314 = vmatpush1.msra.mxu0 0.0
      %315 = vmatprep.subr.mxu0 0.0
      %316 = vmatpush1.msra.mxu0 0.0
      %317 = vmatprep.subr.mxu0 0.0
      %318 = vmatpush1.msra.mxu0 0.0
      %319 = vmatprep.subr.mxu0 0.0
      %320 = vmatpush1.msra.mxu0 0.0
      %321 = vmatprep.subr.mxu0 0.0
      %322 = vmatpush1.msra.mxu0 0.0
      %323 = vmatprep.subr.mxu0 0.0
      %324 = vmatpush1.msra.mxu0 0.0
      %325 = vmatprep.subr.mxu0 0.0
      %326 = vmatpush1.msra.mxu0 0.0
      %327 = vmatprep.subr.mxu0 0.0
      %328 = vmatpush1.msra.mxu0 0.0
      %329 = vmatprep.subr.mxu0 0.0
      %330 = vmatpush1.msra.mxu0 0.0
      %331 = vmatprep.subr.mxu0 0.0
      %332 = vmatpush1.msra.mxu0 0.0
      %333 = vmatprep.subr.mxu0 0.0
      %334 = vmatpush1.msra.mxu0 0.0
      %335 = vmatprep.subr.mxu0 0.0
      %336 = vmatpush1.msra.mxu0 0.0
      %337 = vmatprep.subr.mxu0 0.0
      %338 = vmatpush1.msra.mxu0 0.0
      %339 = vmatprep.subr.mxu0 0.0
      %340 = vmatpush1.msra.mxu0 0.0
      %341 = vmatprep.mubr.f32.mxu0 0.0
      %342 = vmatmul.mubr.f32.gmra.mrb[0].mxu0 %v268
      %v343 = vpop.f32.mrb[0].mxu0
      %v344 = vadd.f32 %v259, %v343
      %v345 = vpop.f32.mrb[0].mxu0
      %346 = vmatprep.mubr.f32.mxu0 0.0
      %347 = vmatmul.mubr.f32.gmra.mrb[0].mxu0 %v271
      %v348 = vpop.f32.mrb[0].mxu0
      %v349 = vadd.f32 %v264, %v348
      %v350 = vpop.f32.mrb[0].mxu0
      %351 = vdwg.mxu0
      %v352 = vmul.f32 %v344, 0.5
      %v353 = vmul.f32 %v349, 0.5
      %v354 = vmul.f32 %v344, 0.70710677
      %v355 = vmul.f32 %v349, 0.70710677
      %v356 = verf.f32.pop %v354
      %v357 = verf.f32.pop %v355
      %v358 = vadd.f32 %v356, 1.0
      %v359 = vadd.f32 %v357, 1.0
      %v360 = vmul.f32 %v352, %v358
      %v361 = vmul.f32 %v353, %v359
      %v362 = vld [vmem:[%s3] sm:$0xf]
      %v363 = vld [vmem:[%s4] sm:$0xf]
      %365 = vset.pattern.permute.xlu0 0
      %366 = vperm.xlu0 %365, %v363
      %v367 = vpop.permute.xlu0 %366
      %vm369 = vcmask 130048
      %v371 = vsel %vm369, %v362, 0
      %373 = vmatprep.subr.mxu0 0.0
      %374 = vmatpush1.msra.mxu0 %v360
      %375 = vmatprep.subr.mxu0 0.0
      %376 = vmatpush1.msra.mxu0 %v361
      %377 = vmatprep.subr.mxu0 0.0
      %378 = vmatpush1.msra.mxu0 0.0
      %379 = vmatprep.subr.mxu0 0.0
      %380 = vmatpush1.msra.mxu0 0.0
      %381 = vmatprep.subr.mxu0 0.0
      %382 = vmatpush1.msra.mxu0 0.0
      %383 = vmatprep.subr.mxu0 0.0
      %384 = vmatpush1.msra.mxu0 0.0
      %385 = vmatprep.subr.mxu0 0.0
      %386 = vmatpush1.msra.mxu0 0.0
      %387 = vmatprep.subr.mxu0 0.0
      %388 = vmatpush1.msra.mxu0 0.0
      %389 = vmatprep.subr.mxu0 0.0
      %390 = vmatpush1.msra.mxu0 0.0
      %391 = vmatprep.subr.mxu0 0.0
      %392 = vmatpush1.msra.mxu0 0.0
      %393 = vmatprep.subr.mxu0 0.0
      %394 = vmatpush1.msra.mxu0 0.0
      %395 = vmatprep.subr.mxu0 0.0
      %396 = vmatpush1.msra.mxu0 0.0
      %397 = vmatprep.subr.mxu0 0.0
      %398 = vmatpush1.msra.mxu0 0.0
      %399 = vmatprep.subr.mxu0 0.0
      %400 = vmatpush1.msra.mxu0 0.0
      %401 = vmatprep.subr.mxu0 0.0
      %402 = vmatpush1.msra.mxu0 0.0
      %403 = vmatprep.subr.mxu0 0.0
      %404 = vmatpush1.msra.mxu0 0.0
      %405 = vmatprep.subr.mxu0 0.0
      %406 = vmatpush1.msra.mxu0 0.0
      %407 = vmatprep.subr.mxu0 0.0
      %408 = vmatpush1.msra.mxu0 0.0
      %409 = vmatprep.subr.mxu0 0.0
      %410 = vmatpush1.msra.mxu0 0.0
      %411 = vmatprep.subr.mxu0 0.0
      %412 = vmatpush1.msra.mxu0 0.0
      %413 = vmatprep.subr.mxu0 0.0
      %414 = vmatpush1.msra.mxu0 0.0
      %415 = vmatprep.subr.mxu0 0.0
      %416 = vmatpush1.msra.mxu0 0.0
      %417 = vmatprep.subr.mxu0 0.0
      %418 = vmatpush1.msra.mxu0 0.0
      %419 = vmatprep.subr.mxu0 0.0
      %420 = vmatpush1.msra.mxu0 0.0
      %421 = vmatprep.subr.mxu0 0.0
      %422 = vmatpush1.msra.mxu0 0.0
      %423 = vmatprep.subr.mxu0 0.0
      %424 = vmatpush1.msra.mxu0 0.0
      %425 = vmatprep.subr.mxu0 0.0
      %426 = vmatpush1.msra.mxu0 0.0
      %427 = vmatprep.subr.mxu0 0.0
      %428 = vmatpush1.msra.mxu0 0.0
      %429 = vmatprep.subr.mxu0 0.0
      %430 = vmatpush1.msra.mxu0 0.0
      %431 = vmatprep.subr.mxu0 0.0
      %432 = vmatpush1.msra.mxu0 0.0
      %433 = vmatprep.subr.mxu0 0.0
      %434 = vmatpush1.msra.mxu0 0.0
      %435 = vmatprep.subr.mxu0 0.0
      %436 = vmatpush1.msra.mxu0 0.0
      %437 = vmatprep.mubr.f32.mxu0 0.0
      %438 = vmatmul.mubr.f32.gmra.mrb[0].mxu0 %v371
      %v439 = vpop.f32.mrb[0].mxu0
      %v440 = vadd.f32 %v367, %v439
      %v441 = vpop.f32.mrb[0].mxu0
      %442 = vdwg.mxu0
      %443 = vst [vmem:[%s250] sm:$0xf] %v440
      %p444 = scmp.lt.s32.totalorder %s20, 1
      %s445 = scalar_select %p444, %s20, 1
      %p446 = scmp.lt.s32.totalorder %s21, 0
      %s447 = scalar_select %p446, %s21, 0
      %s448 = sadd.s32 %s447, %s445
      %s449 = smul.addr %s448, 4
      %s450 = scalar_lea.vmem %s5, %s449
      // Predicated region
      $region41: #{_cmlp_forward_impl.1} parent=39 // pred_check
        %p451 = pneg %p160
      $region42: #{_cmlp_forward_impl.1} parent=39 // pred_check_branch
        %453 = sbr.rel (%p451) target = $region44
      $region43: #{_cmlp_forward_impl.1} parent=39 // pred_region
        _
      $region44: #{_cmlp_forward_impl.1} parent=39 // pred_fallthru
        _
    $region40: #{_cmlp_forward_impl.1} parent=5 // pred_fallthru
      _
    %p454 = scmp.le.s32.totalorder 2, %s11
    // Predicated region
    $region45: #{_cmlp_forward_impl.1} parent=5 // pred_check
      %p455 = pneg %p454
    $region46: #{_cmlp_forward_impl.1} parent=5 // pred_check_branch
      %457 = sbr.rel (%p455) target = $region48
    $region47: #{_cmlp_forward_impl.1} parent=5 // pred_region
      %s458 = ssub.s32 %s11, 2
      // Predicated region
      $region49: #{_cmlp_forward_impl.1} parent=47 // pred_check
        %p459 = pneg %p166
      $region50: #{_cmlp_forward_impl.1} parent=47 // pred_check_branch
        %461 = sbr.rel (%p459) target = $region52
      $region51: #{_cmlp_forward_impl.1} parent=47 // pred_region
        %p462 = scmp.lt.s32.totalorder %s22, 1
        %s463 = scalar_select %p462, %s22, 1
        %p464 = scmp.lt.s32.totalorder %s23, 0
        %s465 = scalar_select %p464, %s23, 0
        %s466 = sadd.s32 %s465, %s463
        %s467 = smul.addr %s466, 4
        %s468 = scalar_lea.vmem %s5, %s467
      $region52: #{_cmlp_forward_impl.1} parent=47 // pred_fallthru
        _
    $region48: #{_cmlp_forward_impl.1} parent=5 // pred_fallthru
      _
  $region6: #{_cmlp_forward_impl.1} parent=0 // loop_footer
    %s15 = sadd.s32 1, %s11
  $region7: #{_cmlp_forward_impl.1} parent=0 // loop_footer_branch
    %10 = sbr.rel target = $region3
  $region8: #{_cmlp_forward_impl.1} parent=0 // loop_exit
    _

</llo_original>
